<compile_context>
chip_gen: v7x
topology: tpu7x:2x2x1
jax: 0.10.0
libtpu: 0.0.40
codegen_flags: <defaults>
</compile_context>

<pallas_src>
import functools
import math

import jax
import jax.numpy as jnp
from jax import lax
from jax.experimental import pallas as pl
from jax.experimental.pallas import tpu as pltpu


def _round_up(x, m):
    return ((x + m - 1) // m) * m


def _sublane_multiple(dtype):
    # Minimum second-to-last tile dimension: 8 (f32), 16 (bf16), 32 (int8/fp8).
    itemsize = jnp.dtype(dtype).itemsize
    return {4: 8, 2: 16, 1: 32}.get(itemsize, 8)


def _flash_attn_kernel(q_ref, k_ref, v_ref, o_ref, m_ref, l_ref, acc_ref, *,
                       scale, valid_k, block_k, mask_tail, use_bf16_mxu):
    # Blocks: q_ref (1, bq, Dp), k_ref (1, bk, Dp), v_ref (1, bk, Dvp), o_ref (1, bq, Dvp)
    # Scratch (f32): m_ref/l_ref (bq, 1), acc_ref (bq, Dvp) — persist across the kv axis.
    kv = pl.program_id(2)

    @pl.when(kv == 0)
    def _init():
        m_ref[...] = jnp.full_like(m_ref, -jnp.inf)
        l_ref[...] = jnp.zeros_like(l_ref)
        acc_ref[...] = jnp.zeros_like(acc_ref)

    q = q_ref[0]
    if scale is not None:
        # Scale the (bq, D) query tile instead of the (bq, Sk) scores.
        q = q * jnp.asarray(scale, dtype=q.dtype)
    k = k_ref[0]
    v = v_ref[0]
    if use_bf16_mxu:
        q = q.astype(jnp.bfloat16)
        k = k.astype(jnp.bfloat16)
        v = v.astype(jnp.bfloat16)

    # scores = q @ k^T  (contract feature dim; f32 accumulation on the MXU)
    s = lax.dot_general(q, k, (((1,), (1,)), ((), ())),
                        preferred_element_type=jnp.float32)       # (bq, bk)

    if mask_tail:
        # Only emitted when the padded key length exceeds valid_k; a no-op select on all
        # but the final key block (same semantics as masked_fill_(-inf) on padded keys).
        col = kv * block_k + lax.broadcasted_iota(jnp.int32, s.shape, 1)
        s = jnp.where(col < valid_k, s, -jnp.inf)

    # Online softmax update (all statistics in f32).
    m_prev = m_ref[...]
    m_new = jnp.maximum(m_prev, jnp.max(s, axis=-1, keepdims=True))
    alpha = jnp.exp(m_prev - m_new)
    p = jnp.exp(s - m_new)
    l_ref[...] = alpha * l_ref[...] + jnp.sum(p, axis=-1, keepdims=True)
    p = p.astype(jnp.bfloat16) if use_bf16_mxu else p.astype(v.dtype)
    acc_ref[...] = alpha * acc_ref[...] + jnp.dot(p, v, preferred_element_type=jnp.float32)
    m_ref[...] = m_new

    # TODO(synk): training-mode nn.Dropout(0.5) on the attention probabilities is not
    # implemented (eval-mode forward only).

    @pl.when(kv == pl.num_programs(2) - 1)
    def _finalize():
        # Deferred normalization: divide the (bq, Dvp) accumulator once, not the
        # (bq, Sk) probabilities.  (pl.reciprocal(..., approx=True) is available if
        # EUP-approx accuracy is acceptable.)
        inv_l = pl.reciprocal(l_ref[...], approx=False)
        o_ref[0] = (acc_ref[...] * inv_l).astype(o_ref.dtype)


def multimodal_attention_forward(q, k, v, scale=None, attn_mask=None, *,
                                 block_q=128, block_k=512, use_bf16_mxu=False):
    """Pallas version of multimodal_attention.forward (eval mode).

    q: (B, Sq, D), k: (B, Sk, D), v: (B, Sk, Dv)  ->  (B, Sq, Dv)
    scale: optional scalar applied to the logits (skipped if falsy, matching `if scale:`).
    block_q/block_k: tile sizes; defaults work on all generations (v5e: keep block_q=128,
    block_k<=512; v6e/v7x with large Sq can use block_q=256).
    """
    # TODO(synk): boolean attn_mask (masked_fill_ with -inf) is not implemented; pass None.
    assert attn_mask is None, "attn_mask not supported in this kernel"

    B, Sq, D = q.shape
    Bk, Sk, Dk = k.shape
    Bv, Skv, Dv = v.shape
    assert Bk == B and Bv == B and Dk == D and Skv == Sk
    assert Sk >= 1, "need at least one key position (softmax over 0 keys is NaN)"
    # Match PyTorch `if scale:` truthiness (scale=0.0 means "no scaling").
    scale = scale if scale else None

    sub_q = _sublane_multiple(q.dtype)

    # Lane-dense padding (only when required): feature dims to multiples of 128,
    # key length to a multiple of the key block, query length to a multiple of bq.
    Dp = _round_up(D, 128)
    Dvp = _round_up(Dv, 128)
    bq = _round_up(min(block_q, _round_up(Sq, sub_q)), sub_q)
    Sqp = _round_up(Sq, bq)
    bk = min(_round_up(block_k, 128), _round_up(Sk, 128))
    Skp = _round_up(Sk, bk)

    def _maybe_pad(x, s_target, d_target):
        _, s, d = x.shape
        if s == s_target and d == d_target:
            return x
        return jnp.pad(x, ((0, 0), (0, s_target - s), (0, d_target - d)))

    qp = _maybe_pad(q, Sqp, Dp)
    kp = _maybe_pad(k, Skp, Dp)
    vp = _maybe_pad(v, Skp, Dvp)

    grid = (B, Sqp // bq, Skp // bk)
    mask_tail = Skp > Sk

    kernel = functools.partial(
        _flash_attn_kernel, scale=scale, valid_k=Sk, block_k=bk,
        mask_tail=mask_tail, use_bf16_mxu=use_bf16_mxu)

    # Explicit scoped-VMEM budget from the actual block sizes (+50% headroom),
    # floored at 32 MiB and capped at v7x's 64 MiB physical VMEM.
    in_itemsize = jnp.dtype(q.dtype).itemsize
    blk_bytes = 2 * in_itemsize * (bq * Dp + bk * Dp + bk * Dvp + bq * Dvp)  # double-buffered q,k,v,o
    scratch_bytes = 4 * (2 * bq * 128 + bq * Dvp)                            # m, l (lane-padded), acc
    temp_bytes = 4 * 4 * bq * bk                                             # s/p/select temporaries
    vmem_limit = int(min(64 * 1024 * 1024,
                         max(32 * 1024 * 1024,
                             int(1.5 * (blk_bytes + scratch_bytes + temp_bytes)))))

    cost = pl.CostEstimate(
        flops=int(2 * B * Sqp * Skp * (Dp + Dvp)),
        transcendentals=int(B * Sqp * Skp),
        bytes_accessed=int(in_itemsize * (qp.size + kp.size + vp.size + B * Sqp * Dvp)),
    )

    out_padded = pl.pallas_call(
        kernel,
        out_shape=jax.ShapeDtypeStruct((B, Sqp, Dvp), q.dtype),
        grid_spec=pltpu.PrefetchScalarGridSpec(
            num_scalar_prefetch=0,
            grid=grid,
            in_specs=[
                pl.BlockSpec((1, bq, Dp), lambda b, i, j: (b, i, 0)),
                pl.BlockSpec((1, bk, Dp), lambda b, i, j: (b, j, 0)),
                pl.BlockSpec((1, bk, Dvp), lambda b, i, j: (b, j, 0)),
            ],
            out_specs=pl.BlockSpec((1, bq, Dvp), lambda b, i, j: (b, i, 0)),
            scratch_shapes=[
                pltpu.VMEM((bq, 1), jnp.float32),    # running max m
                pltpu.VMEM((bq, 1), jnp.float32),    # running denom l
                pltpu.VMEM((bq, Dvp), jnp.float32),  # output accumulator
            ],
        ),
        compiler_params=pltpu.CompilerParams(
            dimension_semantics=("parallel", "parallel", "arbitrary"),
            vmem_limit_bytes=vmem_limit,
        ),
        cost_estimate=cost,
    )(qp, kp, vp)

    if Sqp != Sq or Dvp != Dv:
        return out_padded[:, :Sq, :Dv]
    return out_padded


if __name__ == "__main__":
    # Small shapes consistent with the module: q/k/v are (batch, seq, dim).
    batch, seq, dim = 2, 8, 32

    key = jax.random.PRNGKey(0)
    kq, kk, kv_ = jax.random.split(key, 3)
    q = jax.random.normal(kq, (batch, seq, dim), jnp.float32)
    k = jax.random.normal(kk, (batch, seq, dim), jnp.float32)
    v = jax.random.normal(kv_, (batch, seq, dim), jnp.float32)
    scale = 1.0 / math.sqrt(dim)

    def reference(q, k, v, scale):
        # Pure-JAX reference of the forward semantics (dropout = identity in eval mode).
        s = jnp.einsum("bqd,bkd->bqk", q, k)
        if scale:
            s = s * scale
        attn = jax.nn.softmax(s, axis=-1)
        return jnp.einsum("bqk,bkd->bqd", attn, v)

    out = jax.block_until_ready(multimodal_attention_forward(q, k, v, scale=scale))
    ref = reference(q, k, v, scale)
    assert out.shape == (batch, seq, dim)
    assert jnp.allclose(out, ref, atol=1e-5, rtol=1e-5)

    # Cross-KV-block + padded-tail check: 3 key blocks of 128 (online softmax across
    # blocks, -inf masking of the padded tail of the last block).
    seq_k = 300
    k2 = jax.random.normal(jax.random.PRNGKey(1), (batch, seq_k, dim), jnp.float32)
    v2 = jax.random.normal(jax.random.PRNGKey(2), (batch, seq_k, dim), jnp.float32)
    out2 = jax.block_until_ready(
        multimodal_attention_forward(q, k2, v2, scale=scale, block_k=128))
    ref2 = reference(q, k2, v2, scale)
    assert out2.shape == (batch, seq, dim)
    assert jnp.allclose(out2, ref2, atol=1e-4, rtol=1e-4)

    print("KERNEL_OK")
</pallas_src>

<mosaic_0001>
module attributes {stable_mosaic.version = 11 : i64} {
  func.func @_flash_attn_kernel(%arg0: i32, %arg1: i32, %arg2: i32, %arg3: memref<1x8x128xf32, #tpu.memory_space<vmem>>, %arg4: memref<1x128x128xf32, #tpu.memory_space<vmem>>, %arg5: memref<1x128x128xf32, #tpu.memory_space<vmem>>, %arg6: memref<1x8x128xf32, #tpu.memory_space<vmem>>, %arg7: memref<8x1xf32, #tpu.memory_space<vmem>>, %arg8: memref<8x1xf32, #tpu.memory_space<vmem>>, %arg9: memref<8x128xf32, #tpu.memory_space<vmem>>) attributes {dimension_semantics = [#tpu.dimension_semantics<parallel>, #tpu.dimension_semantics<parallel>, #tpu.dimension_semantics<arbitrary>], iteration_bounds = array<i64: 2, 1, 1>, scalar_prefetch = 0 : i64, scratch_operands = 3 : i64, tpu.core_type = #tpu.core_type<tc>, window_params = [{transform_indices = @transform_0, window_bounds = array<i64: 1, 8, 128>}, {transform_indices = @transform_1, window_bounds = array<i64: 1, 128, 128>}, {transform_indices = @transform_2, window_bounds = array<i64: 1, 128, 128>}, {transform_indices = @transform_3, window_bounds = array<i64: 1, 8, 128>}]} {
    %c0_i32 = arith.constant 0 : i32
    %0 = arith.cmpi eq, %arg2, %c0_i32 : i32
    %1 = arith.extui %0 : i1 to i32
    %c0_i32_0 = arith.constant 0 : i32
    %2 = arith.cmpi ne, %1, %c0_i32_0 : i32
    scf.if %2 {
      %cst_28 = arith.constant 0xFF800000 : f32
      %45 = vector.broadcast %cst_28 : f32 to vector<8x1xf32>
      %c0_29 = arith.constant 0 : index
      %c0_30 = arith.constant 0 : index
      %46 = vector.load %arg7[%c0_29, %c0_30] : memref<8x1xf32, #tpu.memory_space<vmem>>, vector<8x1xf32>
      tpu.vector_store %arg7[%c0_29, %c0_30], %45 {strides = array<i32>} : memref<8x1xf32, #tpu.memory_space<vmem>>, vector<8x1xf32>,
      %cst_31 = arith.constant 0.000000e+00 : f32
      %47 = vector.broadcast %cst_31 : f32 to vector<8x1xf32>
      %c0_32 = arith.constant 0 : index
      %c0_33 = arith.constant 0 : index
      %48 = vector.load %arg8[%c0_32, %c0_33] : memref<8x1xf32, #tpu.memory_space<vmem>>, vector<8x1xf32>
      tpu.vector_store %arg8[%c0_32, %c0_33], %47 {strides = array<i32>} : memref<8x1xf32, #tpu.memory_space<vmem>>, vector<8x1xf32>,
      %cst_34 = arith.constant 0.000000e+00 : f32
      %49 = vector.broadcast %cst_34 : f32 to vector<8x128xf32>
      %c0_35 = arith.constant 0 : index
      %c0_36 = arith.constant 0 : index
      %50 = vector.load %arg9[%c0_35, %c0_36] : memref<8x128xf32, #tpu.memory_space<vmem>>, vector<8x128xf32>
      tpu.vector_store %arg9[%c0_35, %c0_36], %49 {strides = array<i32>} : memref<8x128xf32, #tpu.memory_space<vmem>>, vector<8x128xf32>,
    } else {
    }
    %c0 = arith.constant 0 : index
    %c0_1 = arith.constant 0 : index
    %c0_2 = arith.constant 0 : index
    %3 = vector.load %arg3[%c0, %c0_1, %c0_2] : memref<1x8x128xf32, #tpu.memory_space<vmem>>, vector<1x8x128xf32>
    %4 = vector.shape_cast %3 : vector<1x8x128xf32> to vector<8x128xf32>
    %cst = arith.constant 0.176776692 : f32
    %5 = vector.broadcast %cst : f32 to vector<8x128xf32>
    %6 = arith.mulf %4, %5 : vector<8x128xf32>
    %c0_3 = arith.constant 0 : index
    %c0_4 = arith.constant 0 : index
    %c0_5 = arith.constant 0 : index
    %7 = vector.load %arg4[%c0_3, %c0_4, %c0_5] : memref<1x128x128xf32, #tpu.memory_space<vmem>>, vector<1x128x128xf32>
    %8 = vector.shape_cast %7 : vector<1x128x128xf32> to vector<128x128xf32>
    %c0_6 = arith.constant 0 : index
    %c0_7 = arith.constant 0 : index
    %c0_8 = arith.constant 0 : index
    %9 = vector.load %arg5[%c0_6, %c0_7, %c0_8] : memref<1x128x128xf32, #tpu.memory_space<vmem>>, vector<1x128x128xf32>
    %10 = vector.shape_cast %9 : vector<1x128x128xf32> to vector<128x128xf32>
    %cst_9 = arith.constant dense<0.000000e+00> : vector<8x128xf32>
    %11 = tpu.matmul %6, %8, %cst_9 {dimension_numbers = #tpu.dot_dimension_numbers<[1], [1], [0], [0], [0, 0, 1, 0], [], []>} : vector<8x128xf32>, vector<128x128xf32>, vector<8x128xf32> -> vector<8x128xf32>
    %c128_i32 = arith.constant 128 : i32
    %12 = arith.muli %arg2, %c128_i32 : i32
    %13 = tpu.iota {dimensions = array<i32: 1>} : vector<8x128xi32>
    %14 = vector.broadcast %12 : i32 to vector<8x128xi32>
    %15 = arith.addi %14, %13 : vector<8x128xi32>
    %c8_i32 = arith.constant 8 : i32
    %16 = vector.broadcast %c8_i32 : i32 to vector<8x128xi32>
    %17 = arith.cmpi slt, %15, %16 : vector<8x128xi32>
    %cst_10 = arith.constant 0xFF800000 : f32
    %18 = vector.broadcast %cst_10 : f32 to vector<8x128xf32>
    %19 = arith.select %17, %11, %18 : vector<8x128xi1>, vector<8x128xf32>
    %c0_11 = arith.constant 0 : index
    %c0_12 = arith.constant 0 : index
    %20 = vector.load %arg7[%c0_11, %c0_12] : memref<8x1xf32, #tpu.memory_space<vmem>>, vector<8x1xf32>
    %cst_13 = arith.constant dense<0xFF800000> : vector<8xf32>
    %21 = vector.multi_reduction <maximumf>, %19, %cst_13 [1] : vector<8x128xf32> to vector<8xf32>
    %22 = vector.shape_cast %21 : vector<8xf32> to vector<8x1xf32>
    %23 = arith.maximumf %20, %22 : vector<8x1xf32>
    %24 = arith.subf %20, %23 : vector<8x1xf32>
    %25 = math.exp %24 : vector<8x1xf32>
    %26 = vector.broadcast %23 : vector<8x1xf32> to vector<8x128xf32>
    %27 = arith.subf %19, %26 : vector<8x128xf32>
    %28 = math.exp %27 : vector<8x128xf32>
    %c0_14 = arith.constant 0 : index
    %c0_15 = arith.constant 0 : index
    %29 = vector.load %arg8[%c0_14, %c0_15] : memref<8x1xf32, #tpu.memory_space<vmem>>, vector<8x1xf32>
    %30 = arith.mulf %25, %29 : vector<8x1xf32>
    %cst_16 = arith.constant dense<0.000000e+00> : vector<8xf32>
    %31 = vector.multi_reduction <add>, %28, %cst_16 [1] : vector<8x128xf32> to vector<8xf32>
    %32 = vector.shape_cast %31 : vector<8xf32> to vector<8x1xf32>
    %33 = arith.addf %30, %32 : vector<8x1xf32>
    %c0_17 = arith.constant 0 : index
    %c0_18 = arith.constant 0 : index
    %34 = vector.load %arg8[%c0_17, %c0_18] : memref<8x1xf32, #tpu.memory_space<vmem>>, vector<8x1xf32>
    tpu.vector_store %arg8[%c0_17, %c0_18], %33 {strides = array<i32>} : memref<8x1xf32, #tpu.memory_space<vmem>>, vector<8x1xf32>,
    %c0_19 = arith.constant 0 : index
    %c0_20 = arith.constant 0 : index
    %35 = vector.load %arg9[%c0_19, %c0_20] : memref<8x128xf32, #tpu.memory_space<vmem>>, vector<8x128xf32>
    %36 = vector.broadcast %25 : vector<8x1xf32> to vector<8x128xf32>
    %37 = arith.mulf %36, %35 : vector<8x128xf32>
    %cst_21 = arith.constant dense<0.000000e+00> : vector<8x128xf32>
    %38 = tpu.matmul %28, %10, %cst_21 {dimension_numbers = #tpu.dot_dimension_numbers<[1], [0], [0], [1], [0, 0, 1, 1], [], []>} : vector<8x128xf32>, vector<128x128xf32>, vector<8x128xf32> -> vector<8x128xf32>
    %39 = arith.addf %37, %38 : vector<8x128xf32>
    %c0_22 = arith.constant 0 : index
    %c0_23 = arith.constant 0 : index
    %40 = vector.load %arg9[%c0_22, %c0_23] : memref<8x128xf32, #tpu.memory_space<vmem>>, vector<8x128xf32>
    tpu.vector_store %arg9[%c0_22, %c0_23], %39 {strides = array<i32>} : memref<8x128xf32, #tpu.memory_space<vmem>>, vector<8x128xf32>,
    %c0_24 = arith.constant 0 : index
    %c0_25 = arith.constant 0 : index
    %41 = vector.load %arg7[%c0_24, %c0_25] : memref<8x1xf32, #tpu.memory_space<vmem>>, vector<8x1xf32>
    tpu.vector_store %arg7[%c0_24, %c0_25], %23 {strides = array<i32>} : memref<8x1xf32, #tpu.memory_space<vmem>>, vector<8x1xf32>,
    %c0_i32_26 = arith.constant 0 : i32
    %42 = arith.cmpi eq, %arg2, %c0_i32_26 : i32
    %43 = arith.extui %42 : i1 to i32
    %c0_i32_27 = arith.constant 0 : i32
    %44 = arith.cmpi ne, %43, %c0_i32_27 : i32
    scf.if %44 {
      %c0_28 = arith.constant 0 : index
      %c0_29 = arith.constant 0 : index
      %45 = vector.load %arg8[%c0_28, %c0_29] : memref<8x1xf32, #tpu.memory_space<vmem>>, vector<8x1xf32>
      %46 = tpu.reciprocal %45 : vector<8x1xf32> -> vector<8x1xf32>
      %c0_30 = arith.constant 0 : index
      %c0_31 = arith.constant 0 : index
      %47 = vector.load %arg9[%c0_30, %c0_31] : memref<8x128xf32, #tpu.memory_space<vmem>>, vector<8x128xf32>
      %48 = vector.broadcast %46 : vector<8x1xf32> to vector<8x128xf32>
      %49 = arith.mulf %47, %48 : vector<8x128xf32>
      %c0_32 = arith.constant 0 : index
      %c0_33 = arith.constant 0 : index
      %c0_34 = arith.constant 0 : index
      %50 = vector.load %arg6[%c0_32, %c0_33, %c0_34] : memref<1x8x128xf32, #tpu.memory_space<vmem>>, vector<1x8x128xf32>
      %51 = vector.shape_cast %50 : vector<1x8x128xf32> to vector<8x128xf32>
      %52 = vector.shape_cast %49 : vector<8x128xf32> to vector<1x8x128xf32>
      tpu.vector_store %arg6[%c0_32, %c0_33, %c0_34], %52 {strides = array<i32>} : memref<1x8x128xf32, #tpu.memory_space<vmem>>, vector<1x8x128xf32>,
    } else {
    }
    return
  }
  func.func @transform_0(%arg0: i32, %arg1: i32, %arg2: i32) -> (i32, i32, i32) {
    %c0_i32 = arith.constant 0 : i32
    %c0_i32_0 = arith.constant 0 : i32
    return %arg0, %arg1, %c0_i32 : i32, i32, i32
  }
  func.func @transform_1(%arg0: i32, %arg1: i32, %arg2: i32) -> (i32, i32, i32) {
    %c0_i32 = arith.constant 0 : i32
    %c0_i32_0 = arith.constant 0 : i32
    return %arg0, %arg2, %c0_i32 : i32, i32, i32
  }
  func.func @transform_2(%arg0: i32, %arg1: i32, %arg2: i32) -> (i32, i32, i32) {
    %c0_i32 = arith.constant 0 : i32
    %c0_i32_0 = arith.constant 0 : i32
    return %arg0, %arg2, %c0_i32 : i32, i32, i32
  }
  func.func @transform_3(%arg0: i32, %arg1: i32, %arg2: i32) -> (i32, i32, i32) {
    %c0_i32 = arith.constant 0 : i32
    %c0_i32_0 = arith.constant 0 : i32
    return %arg0, %arg1, %c0_i32 : i32, i32, i32
  }
}

</mosaic_0001>

<llo_original>
// kernel: tpu_custom_call.1
$region0: #{tpu_custom_call.1}
  #allocation0 [shape = 'u32[]', space=smem, size = 0x4, offset = 0x4, fixed_abs, tag = 'smem constant byte address 0x4 - core index']
  #allocation1 [shape = 'u32[144,128]{1,0:T(1,128)}', space=vmem, size = 0x12000, scoped, tag = 'internal scratch']
  #allocation2 [shape = 'f32[8,1]{1,0:T(8,128)}', space=vmem, size = 0x1000, scoped, tag = 'scratch operand']
  #allocation3 [shape = 'f32[8,1]{1,0:T(8,128)}', space=vmem, size = 0x1000, scoped, tag = 'scratch operand']
  #allocation4 [shape = 'f32[8,128]{1,0:T(8,128)}', space=vmem, size = 0x1000, scoped, tag = 'scratch operand']
  %s0 = inlined_call_operand.hbm [shape: f32[2,8,128], index: 0, kind: input, shape index: {}]
  %s1 = inlined_call_operand.hbm [shape: f32[2,128,128], index: 1, kind: input, shape index: {}]
  %s2 = inlined_call_operand.hbm [shape: f32[2,128,128], index: 2, kind: input, shape index: {}]
  %s3 = inlined_call_operand.hbm [shape: f32[2,8,128], index: 3, kind: output, shape index: {}]
  %s4 = sld [smem:[#allocation0]]
  $region65: #{tpu_custom_call.1} parent=0
    _
  %s6 = ssub.s32 1, %s4
  %s7 = scalar_select 0, %s6, %s4
  $region1: #{tpu_custom_call.1} parent=0
    #allocation5 [shape = 'u8[8192]{0}', space=vmem, size = 0x2000, scoped, tag = 'input window, operand 0']
    #allocation6 [shape = 's32[2]{0}', space=sflag, size = 0x8, scoped, tag = 'scoped memory for tpu_custom_call.1']
    #allocation7 [shape = 's32[2]{0}', space=sflag, size = 0x8, scoped, tag = 'scoped memory for tpu_custom_call.1']
    #allocation8 [shape = 'u8[131072]{0}', space=vmem, size = 0x20000, scoped, tag = 'input window, operand 1']
    #allocation9 [shape = 's32[2]{0}', space=sflag, size = 0x8, scoped, tag = 'scoped memory for tpu_custom_call.1']
    #allocation10 [shape = 'u8[131072]{0}', space=vmem, size = 0x20000, scoped, tag = 'input window, operand 2']
    #allocation11 [shape = 'u8[8192]{0}', space=vmem, size = 0x2000, scoped, tag = 'output window, operand 0']
    %8 = vsyncpa [#allocation6], 0
    %s9 = scalar_lea.sflag [#allocation6], 1
    %10 = vsyncpa %s9, 0
    %11 = vsyncpa [#allocation9], 0
    %s12 = scalar_lea.sflag [#allocation9], 1
    %13 = vsyncpa %s12, 0
    %14 = vsyncpa [#allocation7], 0
    %s15 = scalar_lea.sflag [#allocation7], 1
    %16 = vsyncpa %s15, 0
    loop: start=0, step=1, limit=4
    $region2: #{tpu_custom_call.1} parent=1 // loop_pre_header
      _
    $region3: #{tpu_custom_call.1} parent=1 // loop_header
      %s18 = sphi 0, %s22
      %p19 = scmp.ge.s32.totalorder %s18, 4
      %s25 = sphi 0, %s44
      %s26 = sphi 0, %s40
      %s27 = sphi 0, %s36
      %s28 = sphi 0, %s25
      %s29 = sphi 0, %s26
      %s30 = sphi 0, %s27
      %s31 = sphi 0, %s28
      %s32 = sphi 0, %s29
      %s33 = sphi 0, %s30
      %s49 = sphi 0, %s51
      %s52 = sphi 0, %s49
      %s53 = sphi 0, %s52
      %s69 = sphi 0, %s53
      %s77 = sphi 0, %s79
      %s80 = sphi 0, %s77
      %s81 = sphi 0, %s80
      %s97 = sphi 0, %s81
      %s105 = sphi 0, %s107
      %s108 = sphi 0, %s105
      %s109 = sphi 0, %s108
      %s125 = sphi 0, %s109
      %s133 = sphi 0, %s135
      %s136 = sphi 0, %s133
      %s137 = sphi 0, %s136
      %s153 = sphi 0, %s137
    $region4: #{tpu_custom_call.1} parent=1 // loop_header_branch
      %21 = sbr.rel (%p19) target = $region8
    $region5: #{tpu_custom_call.1} parent=1 // loop_body
      %s23 = ssub.s32 %s18, 1
      %s24 = ssub.s32 %s18, 2
      %s34 = sadd.s32 1, %s27
      %p35 = scmp.ge.s32.totalorder %s34, 1
      %s36 = scalar_select %p35, 0, %s34
      %s37 = sadd.s32 1, %s26
      %s38 = scalar_select %p35, %s37, %s26
      %p39 = scmp.ge.s32.totalorder %s38, 1
      %s40 = scalar_select %p39, 0, %s38
      %s41 = sadd.s32 1, %s25
      %s42 = scalar_select %p39, %s41, %s25
      %p43 = scmp.ge.s32.totalorder %s42, 2
      %s44 = scalar_select %p43, 0, %s42
      %s45 = ssub.s32 %s25, %s44
      %s46 = ssub.s32 %s26, %s40
      %s47 = sor.u32 %s45, %s46
      %p48 = scmp.eq.s32.totalorder %s47, 0
      %s50 = sadd.s32 %s49, 1
      %s51 = scalar_select %p48, %s49, %s50
      %p54 = pneg %p48
      %p55 = scmp.eq.s32.totalorder %s18, 1
      %p56 = por %p54, %p55
      %p57 = scmp.ne.s32.totalorder %s49, %s52
      %p58 = scmp.eq.s32.totalorder %s18, 0
      %p59 = por %p57, %p58
      %p60 = scmp.ne.s32.totalorder %s49, %s52
      %p61 = scmp.eq.s32.totalorder %s23, 1
      %p62 = por %p60, %p61
      %p63 = scmp.ne.s32.totalorder %s52, %s53
      %p64 = scmp.eq.s32.totalorder %s23, 0
      %p65 = por %p63, %p64
      %p66 = scmp.ne.s32.totalorder %s52, %s53
      %p67 = scmp.eq.s32.totalorder %s24, 1
      %p68 = por %p66, %p67
      %p70 = scmp.ne.s32.totalorder %s53, %s69
      %p71 = scmp.eq.s32.totalorder %s24, 0
      %p72 = por %p70, %p71
      %s73 = ssub.s32 %s25, %s44
      %s74 = ssub.s32 %s27, %s36
      %s75 = sor.u32 %s73, %s74
      %p76 = scmp.eq.s32.totalorder %s75, 0
      %s78 = sadd.s32 %s77, 1
      %s79 = scalar_select %p76, %s77, %s78
      %p82 = pneg %p76
      %p83 = scmp.eq.s32.totalorder %s18, 1
      %p84 = por %p82, %p83
      %p85 = scmp.ne.s32.totalorder %s77, %s80
      %p86 = scmp.eq.s32.totalorder %s18, 0
      %p87 = por %p85, %p86
      %p88 = scmp.ne.s32.totalorder %s77, %s80
      %p89 = scmp.eq.s32.totalorder %s23, 1
      %p90 = por %p88, %p89
      %p91 = scmp.ne.s32.totalorder %s80, %s81
      %p92 = scmp.eq.s32.totalorder %s23, 0
      %p93 = por %p91, %p92
      %p94 = scmp.ne.s32.totalorder %s80, %s81
      %p95 = scmp.eq.s32.totalorder %s24, 1
      %p96 = por %p94, %p95
      %p98 = scmp.ne.s32.totalorder %s81, %s97
      %p99 = scmp.eq.s32.totalorder %s24, 0
      %p100 = por %p98, %p99
      %s101 = ssub.s32 %s25, %s44
      %s102 = ssub.s32 %s27, %s36
      %s103 = sor.u32 %s101, %s102
      %p104 = scmp.eq.s32.totalorder %s103, 0
      %s106 = sadd.s32 %s105, 1
      %s107 = scalar_select %p104, %s105, %s106
      %p110 = pneg %p104
      %p111 = scmp.eq.s32.totalorder %s18, 1
      %p112 = por %p110, %p111
      %p113 = scmp.ne.s32.totalorder %s105, %s108
      %p114 = scmp.eq.s32.totalorder %s18, 0
      %p115 = por %p113, %p114
      %p116 = scmp.ne.s32.totalorder %s105, %s108
      %p117 = scmp.eq.s32.totalorder %s23, 1
      %p118 = por %p116, %p117
      %p119 = scmp.ne.s32.totalorder %s108, %s109
      %p120 = scmp.eq.s32.totalorder %s23, 0
      %p121 = por %p119, %p120
      %p122 = scmp.ne.s32.totalorder %s108, %s109
      %p123 = scmp.eq.s32.totalorder %s24, 1
      %p124 = por %p122, %p123
      %p126 = scmp.ne.s32.totalorder %s109, %s125
      %p127 = scmp.eq.s32.totalorder %s24, 0
      %p128 = por %p126, %p127
      %s129 = ssub.s32 %s25, %s44
      %s130 = ssub.s32 %s26, %s40
      %s131 = sor.u32 %s129, %s130
      %p132 = scmp.eq.s32.totalorder %s131, 0
      %s134 = sadd.s32 %s133, 1
      %s135 = scalar_select %p132, %s133, %s134
      %p138 = pneg %p132
      %p139 = scmp.eq.s32.totalorder %s18, 1
      %p140 = por %p138, %p139
      %p141 = scmp.ne.s32.totalorder %s133, %s136
      %p142 = scmp.eq.s32.totalorder %s18, 0
      %p143 = por %p141, %p142
      %p144 = scmp.ne.s32.totalorder %s133, %s136
      %p145 = scmp.eq.s32.totalorder %s23, 1
      %p146 = por %p144, %p145
      %p147 = scmp.ne.s32.totalorder %s136, %s137
      %p148 = scmp.eq.s32.totalorder %s23, 0
      %p149 = por %p147, %p148
      %p150 = scmp.ne.s32.totalorder %s136, %s137
      %p151 = scmp.eq.s32.totalorder %s24, 1
      %p152 = por %p150, %p151
      %p154 = scmp.ne.s32.totalorder %s137, %s153
      %p155 = scmp.eq.s32.totalorder %s24, 0
      %p156 = por %p154, %p155
      %p157 = scmp.le.s32.totalorder 1, %s18
      %p158 = scmp.lt.s32.totalorder %s18, 3
      %p159 = pnand %p157, %p158
      %p160 = pneg %p159
      // Predicated region
      $region9: #{tpu_custom_call.1} parent=5 // pred_check
        _
      $region10: #{tpu_custom_call.1} parent=5 // pred_check_branch
        %162 = sbr.rel (%p159) target = $region12
      $region11: #{tpu_custom_call.1} parent=5 // pred_region
        %s163 = ssub.s32 %s18, 1
      $region12: #{tpu_custom_call.1} parent=5 // pred_fallthru
        _
      %p164 = scmp.lt.s32.totalorder %s18, 2
      // Predicated region
      $region13: #{tpu_custom_call.1} parent=5 // pred_check
        %p165 = pneg %p164
      $region14: #{tpu_custom_call.1} parent=5 // pred_check_branch
        %167 = sbr.rel (%p165) target = $region16
      $region15: #{tpu_custom_call.1} parent=5 // pred_region
        // Predicated region
        $region17: #{tpu_custom_call.1} parent=15 // pred_check
          %p168 = pneg %p59
        $region18: #{tpu_custom_call.1} parent=15 // pred_check_branch
          %170 = sbr.rel (%p168) target = $region20
        $region19: #{tpu_custom_call.1} parent=15 // pred_region
          %s171 = sand.u32 %s49, 1
          %s172 = scalar_lea.sflag [#allocation6], %s171
          %s173 = sand.u32 %s49, 1
          %s174 = smul.addr %s173, 8
          %s175 = scalar_lea.vmem [#allocation5], %s174
          %s177 = ssub.s32 128, 128
          %178 = vsyncadd %s172, %s177
          %s179 = sadd.s32 %s26, %s25
          %s180 = smul.addr %s179, 128
          %s181 = scalar_lea.hbm %s0, %s180
          %s183 = sshll.u32 %s175, 4
          %s184 = int_to_ptr.vmem [resolvable:$true] %s183
          %186 = dma.hbm_to_vmem [thread:$0]  %s181, 128, %s184, %s172
        $region20: #{tpu_custom_call.1} parent=15 // pred_fallthru
          _
        // Predicated region
        $region21: #{tpu_custom_call.1} parent=15 // pred_check
          %p187 = pneg %p87
        $region22: #{tpu_custom_call.1} parent=15 // pred_check_branch
          %189 = sbr.rel (%p187) target = $region24
        $region23: #{tpu_custom_call.1} parent=15 // pred_region
          %s190 = sand.u32 %s18, 1
          %s191 = scalar_lea.sflag [#allocation9], %s190
          %s192 = sand.u32 %s77, 1
          %s193 = smul.addr %s192, 128
          %s194 = scalar_lea.vmem [#allocation8], %s193
          %s195 = smul.u32 16, %s27
          %s197 = ssub.s32 2048, 2048
          %198 = vsyncadd %s191, %s197
          %s199 = smul.addr %s25, 16
          %s200 = sadd.s32 %s195, %s199
          %s201 = smul.addr %s200, 128
          %s202 = scalar_lea.hbm %s1, %s201
          %s203 = sshll.u32 %s194, 4
          %s204 = int_to_ptr.vmem [resolvable:$true] %s203
          %209 = dma.hbm_to_vmem [thread:$0]  %s202, 2048, %s204, %s191, 128, 128, 8
        $region24: #{tpu_custom_call.1} parent=15 // pred_fallthru
          _
        // Predicated region
        $region25: #{tpu_custom_call.1} parent=15 // pred_check
          %p210 = pneg %p115
        $region26: #{tpu_custom_call.1} parent=15 // pred_check_branch
          %212 = sbr.rel (%p210) target = $region28
        $region27: #{tpu_custom_call.1} parent=15 // pred_region
          %s213 = sand.u32 %s18, 1
          %s214 = scalar_lea.sflag [#allocation9], %s213
          %s215 = sand.u32 %s105, 1
          %s216 = smul.addr %s215, 128
          %s217 = scalar_lea.vmem [#allocation10], %s216
          %s218 = smul.u32 16, %s27
          %s220 = ssub.s32 2048, 2048
          %221 = vsyncadd %s214, %s220
          %s222 = smul.addr %s25, 16
          %s223 = sadd.s32 %s218, %s222
          %s224 = smul.addr %s223, 128
          %s225 = scalar_lea.hbm %s2, %s224
          %s226 = sshll.u32 %s217, 4
          %s227 = int_to_ptr.vmem [resolvable:$true] %s226
          %232 = dma.hbm_to_vmem [thread:$0]  %s225, 2048, %s227, %s214, 128, 128, 8
        $region28: #{tpu_custom_call.1} parent=15 // pred_fallthru
          _
      $region16: #{tpu_custom_call.1} parent=5 // pred_fallthru
        _
      %p233 = scmp.le.s32.totalorder 1, %s18
      %p234 = scmp.lt.s32.totalorder %s18, 3
      %p235 = pnand %p233, %p234
      %p236 = pneg %p235
      // Predicated region
      $region29: #{tpu_custom_call.1} parent=5 // pred_check
        _
      $region30: #{tpu_custom_call.1} parent=5 // pred_check_branch
        %238 = sbr.rel (%p235) target = $region32
      $region31: #{tpu_custom_call.1} parent=5 // pred_region
        %s239 = ssub.s32 %s18, 1
        %s240 = sand.u32 %s52, 1
        %s241 = scalar_lea.sflag [#allocation6], %s240
        %s242 = sand.u32 %s52, 1
        %s243 = smul.addr %s242, 8
        %s244 = scalar_lea.vmem [#allocation5], %s243
        // Predicated region
        $region33: #{tpu_custom_call.1} parent=31 // pred_check
          %p245 = pneg %p65
        $region34: #{tpu_custom_call.1} parent=31 // pred_check_branch
          %247 = sbr.rel (%p245) target = $region36
        $region35: #{tpu_custom_call.1} parent=31 // pred_region
          %248 = dma.done %s241, 128
        $region36: #{tpu_custom_call.1} parent=31 // pred_fallthru
          _
        %s249 = sand.u32 %s23, 1
        %s250 = scalar_lea.sflag [#allocation9], %s249
        %s251 = sand.u32 %s80, 1
        %s252 = smul.addr %s251, 128
        %s253 = scalar_lea.vmem [#allocation8], %s252
        // Predicated region
        $region37: #{tpu_custom_call.1} parent=31 // pred_check
          %p254 = pneg %p93
        $region38: #{tpu_custom_call.1} parent=31 // pred_check_branch
          %256 = sbr.rel (%p254) target = $region40
        $region39: #{tpu_custom_call.1} parent=31 // pred_region
          %257 = dma.done %s250, 2048
        $region40: #{tpu_custom_call.1} parent=31 // pred_fallthru
          _
        %s258 = sand.u32 %s23, 1
        %s259 = scalar_lea.sflag [#allocation9], %s258
        %s260 = sand.u32 %s108, 1
        %s261 = smul.addr %s260, 128
        %s262 = scalar_lea.vmem [#allocation10], %s261
        // Predicated region
        $region41: #{tpu_custom_call.1} parent=31 // pred_check
          %p263 = pneg %p121
        $region42: #{tpu_custom_call.1} parent=31 // pred_check_branch
          %265 = sbr.rel (%p263) target = $region44
        $region43: #{tpu_custom_call.1} parent=31 // pred_region
          %266 = dma.done %s259, 2048
        $region44: #{tpu_custom_call.1} parent=31 // pred_fallthru
          _
        %s267 = sand.u32 %s52, 1
        %s268 = scalar_lea.sflag [#allocation6], %s267
        %s269 = sand.u32 %s52, 1
        %s270 = smul.addr %s269, 8
        %s271 = scalar_lea.vmem [#allocation5], %s270
        %p272 = pneg %p65
        %p273 = pneg %p62
        %s274 = sand.u32 %s23, 1
        %s275 = scalar_lea.sflag [#allocation9], %s274
        %s276 = sand.u32 %s80, 1
        %s277 = smul.addr %s276, 128
        %s278 = scalar_lea.vmem [#allocation8], %s277
        %p279 = pneg %p93
        %p280 = pneg %p90
        %s281 = sand.u32 %s23, 1
        %s282 = scalar_lea.sflag [#allocation9], %s281
        %s283 = sand.u32 %s108, 1
        %s284 = smul.addr %s283, 128
        %s285 = scalar_lea.vmem [#allocation10], %s284
        %p286 = pneg %p121
        %p287 = pneg %p118
        %p288 = pneg %p149
        %p289 = pneg %p146
        %s290 = sand.u32 %s136, 1
        %s291 = scalar_lea.sflag [#allocation7], %s290
        %s292 = sand.u32 %s136, 1
        %s293 = smul.addr %s292, 8
        %s294 = scalar_lea.vmem [#allocation11], %s293
        %s295 = smul.u32 16, %s30
        %s296 = smul.u32 16, %s30
        %p297 = scmp.eq.s32.totalorder %s30, 0
        // Predicated region
        $region45: #{tpu_custom_call.1} parent=31 // pred_check
          %p298 = pneg %p297
        $region46: #{tpu_custom_call.1} parent=31 // pred_check_branch
          %300 = sbr.rel (%p298) target = $region48
        $region47: #{tpu_custom_call.1} parent=31 // pred_region
          %vm301 = vcmask 7168
          %302 = vst.msk [vmem:[#allocation2] sm:$0xff] %vm301, -inf
          %303 = vst.msk [vmem:[#allocation3] sm:$0xff] %vm301, 0.0
          %304 = vst [vmem:[#allocation4] sm:$0xff] 0.0
        $region48: #{tpu_custom_call.1} parent=31 // pred_fallthru
          _
        %v305 = vld [vmem:[%s244] sm:$0xff]
        %v306 = vmul.f32 %v305, 0.17677669
        %v307 = vld [vmem:[%s253] sm:$0xff]
        %v308 = vld [vmem:[%s253 + $0x8] sm:$0xff]
        %v309 = vld [vmem:[%s253 + $0x10] sm:$0xff]
        %v310 = vld [vmem:[%s253 + $0x18] sm:$0xff]
        %v311 = vld [vmem:[%s253 + $0x20] sm:$0xff]
        %v312 = vld [vmem:[%s253 + $0x28] sm:$0xff]
        %v313 = vld [vmem:[%s253 + $0x30] sm:$0xff]
        %v314 = vld [vmem:[%s253 + $0x38] sm:$0xff]
        %v315 = vld [vmem:[%s253 + $0x40] sm:$0xff]
        %v316 = vld [vmem:[%s253 + $0x48] sm:$0xff]
        %v317 = vld [vmem:[%s253 + $0x50] sm:$0xff]
        %v318 = vld [vmem:[%s253 + $0x58] sm:$0xff]
        %v319 = vld [vmem:[%s253 + $0x60] sm:$0xff]
        %v320 = vld [vmem:[%s253 + $0x68] sm:$0xff]
        %v321 = vld [vmem:[%s253 + $0x70] sm:$0xff]
        %v322 = vld [vmem:[%s253 + $0x78] sm:$0xff]
        %v323 = vld [vmem:[%s262] sm:$0xff]
        %v324 = vld [vmem:[%s262 + $0x8] sm:$0xff]
        %v325 = vld [vmem:[%s262 + $0x10] sm:$0xff]
        %v326 = vld [vmem:[%s262 + $0x18] sm:$0xff]
        %v327 = vld [vmem:[%s262 + $0x20] sm:$0xff]
        %v328 = vld [vmem:[%s262 + $0x28] sm:$0xff]
        %v329 = vld [vmem:[%s262 + $0x30] sm:$0xff]
        %v330 = vld [vmem:[%s262 + $0x38] sm:$0xff]
        %v331 = vld [vmem:[%s262 + $0x40] sm:$0xff]
        %v332 = vld [vmem:[%s262 + $0x48] sm:$0xff]
        %v333 = vld [vmem:[%s262 + $0x50] sm:$0xff]
        %v334 = vld [vmem:[%s262 + $0x58] sm:$0xff]
        %v335 = vld [vmem:[%s262 + $0x60] sm:$0xff]
        %v336 = vld [vmem:[%s262 + $0x68] sm:$0xff]
        %v337 = vld [vmem:[%s262 + $0x70] sm:$0xff]
        %v338 = vld [vmem:[%s262 + $0x78] sm:$0xff]
        %339 = vmatprep.subr.mxu0 0.0
        %340 = vmatpush1.xpose.msra.mxu0 %v307
        %341 = vmatprep.subr.mxu0 0.0
        %342 = vmatpush1.xpose.msra.mxu0 %v308
        %343 = vmatprep.subr.mxu0 0.0
        %344 = vmatpush1.xpose.msra.mxu0 %v309
        %345 = vmatprep.subr.mxu0 0.0
        %346 = vmatpush1.xpose.msra.mxu0 %v310
        %347 = vmatprep.subr.mxu0 0.0
        %348 = vmatpush1.xpose.msra.mxu0 %v311
        %349 = vmatprep.subr.mxu0 0.0
        %350 = vmatpush1.xpose.msra.mxu0 %v312
        %351 = vmatprep.subr.mxu0 0.0
        %352 = vmatpush1.xpose.msra.mxu0 %v313
        %353 = vmatprep.subr.mxu0 0.0
        %354 = vmatpush1.xpose.msra.mxu0 %v314
        %355 = vmatprep.subr.mxu0 0.0
        %356 = vmatpush1.xpose.msra.mxu0 %v315
        %357 = vmatprep.subr.mxu0 0.0
        %358 = vmatpush1.xpose.msra.mxu0 %v316
        %359 = vmatprep.subr.mxu0 0.0
        %360 = vmatpush1.xpose.msra.mxu0 %v317
        %361 = vmatprep.subr.mxu0 0.0
        %362 = vmatpush1.xpose.msra.mxu0 %v318
        %363 = vmatprep.subr.mxu0 0.0
        %364 = vmatpush1.xpose.msra.mxu0 %v319
        %365 = vmatprep.subr.mxu0 0.0
        %366 = vmatpush1.xpose.msra.mxu0 %v320
        %367 = vmatprep.subr.mxu0 0.0
        %368 = vmatpush1.xpose.msra.mxu0 %v321
        %369 = vmatprep.subr.mxu0 0.0
        %370 = vmatpush1.xpose.msra.mxu0 %v322
        %371 = vmatprep.subr.mxu0 0.0
        %372 = vmatpush1.xpose.msra.mxu0 0.0
        %373 = vmatprep.subr.mxu0 0.0
        %374 = vmatpush1.xpose.msra.mxu0 0.0
        %375 = vmatprep.subr.mxu0 0.0
        %376 = vmatpush1.xpose.msra.mxu0 0.0
        %377 = vmatprep.subr.mxu0 0.0
        %378 = vmatpush1.xpose.msra.mxu0 0.0
        %379 = vmatprep.subr.mxu0 0.0
        %380 = vmatpush1.xpose.msra.mxu0 0.0
        %381 = vmatprep.subr.mxu0 0.0
        %382 = vmatpush1.xpose.msra.mxu0 0.0
        %383 = vmatprep.subr.mxu0 0.0
        %384 = vmatpush1.xpose.msra.mxu0 0.0
        %385 = vmatprep.subr.mxu0 0.0
        %386 = vmatpush1.xpose.msra.mxu0 0.0
        %387 = vmatprep.subr.mxu0 0.0
        %388 = vmatpush1.xpose.msra.mxu0 0.0
        %389 = vmatprep.subr.mxu0 0.0
        %390 = vmatpush1.xpose.msra.mxu0 0.0
        %391 = vmatprep.subr.mxu0 0.0
        %392 = vmatpush1.xpose.msra.mxu0 0.0
        %393 = vmatprep.subr.mxu0 0.0
        %394 = vmatpush1.xpose.msra.mxu0 0.0
        %395 = vmatprep.subr.mxu0 0.0
        %396 = vmatpush1.xpose.msra.mxu0 0.0
        %397 = vmatprep.subr.mxu0 0.0
        %398 = vmatpush1.xpose.msra.mxu0 0.0
        %399 = vmatprep.subr.mxu0 0.0
        %400 = vmatpush1.xpose.msra.mxu0 0.0
        %401 = vmatprep.subr.mxu0 0.0
        %402 = vmatpush1.xpose.msra.mxu0 0.0
        %403 = vmatprep.mubr.f32.mxu0 0.0
        %404 = vmatmul.mubr.f32.gmra.mrb[0].mxu0 %v306
        %v405 = vpop.f32.mrb[0].mxu0
        %v406 = vadd.f32 0.0, %v405
        %v407 = vpop.f32.mrb[0].mxu0
        %408 = vdwg.mxu0
        %s409 = smul.u32 %s30, 128
        %v410 = vlaneseq
        %v411 = vand.u32 %v410, 127
        %v412 = vstv %s409
        %v413 = vadd.s32 %v412, %v411
        %vm414 = vcmp.lt.s32.totalorder %v413, 8
        %v415 = vsel %vm414, %v406, -inf
        %v416 = vld [vmem:[#allocation2] sm:$0xff]
        %417 = vmax.xlane.f32.xlu0 %v415
        %v418 = vpop.xlane.xlu0 %417
        %v419 = vmax.f32 %v416, %v418
        %v420 = vsub.f32 %v416, %v419
        %v421 = vmul.f32 %v420, 1.442695
        %v422 = vpow.pop %v421
        %424 = vset.pattern.permute.xlu0 0
        %425 = vperm.xlu0 %424, %v419
        %v426 = vpop.permute.xlu0 %425
        %v428 = vsub.f32 %v415, %v426
        %v429 = vmul.f32 %v428, 1.442695
        %v430 = vpow.pop %v429
        %v431 = vld [vmem:[#allocation3] sm:$0xff]
        %v432 = vmul.f32 %v422, %v431
        %433 = vadd.xlane.f32.xlu0 %v430
        %v434 = vpop.xlane.xlu0 %433
        %v435 = vadd.f32 %v432, %v434
        %vm436 = vcmask 7168
        %437 = vst.msk [vmem:[#allocation3] sm:$0xff] %vm436, %v435
        %v438 = vld [vmem:[#allocation4] sm:$0xff]
        %440 = vset.pattern.permute.xlu0 0
        %441 = vperm.xlu0 %440, %v422
        %v442 = vpop.permute.xlu0 %441
        %v444 = vmul.f32 %v442, %v438
        %445 = vmatprep.subr.mxu0 0.0
        %446 = vmatpush1.msra.mxu0 %v323
        %447 = vmatprep.subr.mxu0 0.0
        %448 = vmatpush1.msra.mxu0 %v324
        %449 = vmatprep.subr.mxu0 0.0
        %450 = vmatpush1.msra.mxu0 %v325
        %451 = vmatprep.subr.mxu0 0.0
        %452 = vmatpush1.msra.mxu0 %v326
        %453 = vmatprep.subr.mxu0 0.0
        %454 = vmatpush1.msra.mxu0 %v327
        %455 = vmatprep.subr.mxu0 0.0
        %456 = vmatpush1.msra.mxu0 %v328
        %457 = vmatprep.subr.mxu0 0.0
        %458 = vmatpush1.msra.mxu0 %v329
        %459 = vmatprep.subr.mxu0 0.0
        %460 = vmatpush1.msra.mxu0 %v330
        %461 = vmatprep.subr.mxu0 0.0
        %462 = vmatpush1.msra.mxu0 %v331
        %463 = vmatprep.subr.mxu0 0.0
        %464 = vmatpush1.msra.mxu0 %v332
        %465 = vmatprep.subr.mxu0 0.0
        %466 = vmatpush1.msra.mxu0 %v333
        %467 = vmatprep.subr.mxu0 0.0
        %468 = vmatpush1.msra.mxu0 %v334
        %469 = vmatprep.subr.mxu0 0.0
        %470 = vmatpush1.msra.mxu0 %v335
        %471 = vmatprep.subr.mxu0 0.0
        %472 = vmatpush1.msra.mxu0 %v336
        %473 = vmatprep.subr.mxu0 0.0
        %474 = vmatpush1.msra.mxu0 %v337
        %475 = vmatprep.subr.mxu0 0.0
        %476 = vmatpush1.msra.mxu0 %v338
        %477 = vmatprep.subr.mxu0 0.0
        %478 = vmatpush1.msra.mxu0 0.0
        %479 = vmatprep.subr.mxu0 0.0
        %480 = vmatpush1.msra.mxu0 0.0
        %481 = vmatprep.subr.mxu0 0.0
        %482 = vmatpush1.msra.mxu0 0.0
        %483 = vmatprep.subr.mxu0 0.0
        %484 = vmatpush1.msra.mxu0 0.0
        %485 = vmatprep.subr.mxu0 0.0
        %486 = vmatpush1.msra.mxu0 0.0
        %487 = vmatprep.subr.mxu0 0.0
        %488 = vmatpush1.msra.mxu0 0.0
        %489 = vmatprep.subr.mxu0 0.0
        %490 = vmatpush1.msra.mxu0 0.0
        %491 = vmatprep.subr.mxu0 0.0
        %492 = vmatpush1.msra.mxu0 0.0
        %493 = vmatprep.subr.mxu0 0.0
        %494 = vmatpush1.msra.mxu0 0.0
        %495 = vmatprep.subr.mxu0 0.0
        %496 = vmatpush1.msra.mxu0 0.0
        %497 = vmatprep.subr.mxu0 0.0
        %498 = vmatpush1.msra.mxu0 0.0
        %499 = vmatprep.subr.mxu0 0.0
        %500 = vmatpush1.msra.mxu0 0.0
        %501 = vmatprep.subr.mxu0 0.0
        %502 = vmatpush1.msra.mxu0 0.0
        %503 = vmatprep.subr.mxu0 0.0
        %504 = vmatpush1.msra.mxu0 0.0
        %505 = vmatprep.subr.mxu0 0.0
        %506 = vmatpush1.msra.mxu0 0.0
        %507 = vmatprep.subr.mxu0 0.0
        %508 = vmatpush1.msra.mxu0 0.0
        %509 = vmatprep.mubr.f32.mxu0 0.0
        %510 = vmatmul.mubr.f32.gmra.mrb[0].mxu0 %v430
        %v511 = vpop.f32.mrb[0].mxu0
        %v512 = vadd.f32 0.0, %v511
        %v513 = vpop.f32.mrb[0].mxu0
        %514 = vdwg.mxu0
        %v515 = vadd.f32 %v444, %v512
        %516 = vst [vmem:[#allocation4] sm:$0xff] %v515
        %517 = vst.msk [vmem:[#allocation2] sm:$0xff] %vm436, %v419
        // Predicated region
        $region49: #{tpu_custom_call.1} parent=31 // pred_check
          %p518 = pneg %p297
        $region50: #{tpu_custom_call.1} parent=31 // pred_check_branch
          %520 = sbr.rel (%p518) target = $region52
        $region51: #{tpu_custom_call.1} parent=31 // pred_region
          %v521 = vld [vmem:[#allocation3] sm:$0xff]
          %v522 = vrcp.pop %v521
          %v523 = vld [vmem:[#allocation4] sm:$0xff]
          %525 = vset.pattern.permute.xlu0 0
          %526 = vperm.xlu0 %525, %v522
          %v527 = vpop.permute.xlu0 %526
          %v529 = vmul.f32 %v523, %v527
          %530 = vst [vmem:[%s294] sm:$0xff] %v529
        $region52: #{tpu_custom_call.1} parent=31 // pred_fallthru
          _
        %s531 = sand.u32 %s136, 1
        %s532 = scalar_lea.sflag [#allocation7], %s531
        %s533 = sand.u32 %s136, 1
        %s534 = smul.addr %s533, 8
        %s535 = scalar_lea.vmem [#allocation11], %s534
        // Predicated region
        $region53: #{tpu_custom_call.1} parent=31 // pred_check
          %p536 = pneg %p146
        $region54: #{tpu_custom_call.1} parent=31 // pred_check_branch
          %538 = sbr.rel (%p536) target = $region56
        $region55: #{tpu_custom_call.1} parent=31 // pred_region
          %s540 = ssub.s32 128, 128
          %541 = vsyncadd %s532, %s540
          %s542 = sadd.s32 %s29, %s28
          %s543 = smul.addr %s542, 128
          %s544 = scalar_lea.hbm %s3, %s543
          %s546 = sshll.u32 %s535, 4
          %s547 = int_to_ptr.vmem [resolvable:$true] %s546
          %549 = dma.vmem_to_hbm [thread:$0]  %s547, 128, %s544, %s532
        $region56: #{tpu_custom_call.1} parent=31 // pred_fallthru
          _
      $region32: #{tpu_custom_call.1} parent=5 // pred_fallthru
        _
      %p550 = scmp.le.s32.totalorder 2, %s18
      // Predicated region
      $region57: #{tpu_custom_call.1} parent=5 // pred_check
        %p551 = pneg %p550
      $region58: #{tpu_custom_call.1} parent=5 // pred_check_branch
        %553 = sbr.rel (%p551) target = $region60
      $region59: #{tpu_custom_call.1} parent=5 // pred_region
        %s554 = ssub.s32 %s18, 2
        // Predicated region
        $region61: #{tpu_custom_call.1} parent=59 // pred_check
          %p555 = pneg %p152
        $region62: #{tpu_custom_call.1} parent=59 // pred_check_branch
          %557 = sbr.rel (%p555) target = $region64
        $region63: #{tpu_custom_call.1} parent=59 // pred_region
          %s558 = sand.u32 %s137, 1
          %s559 = scalar_lea.sflag [#allocation7], %s558
          %s560 = sand.u32 %s137, 1
          %s561 = smul.addr %s560, 8
          %s562 = scalar_lea.vmem [#allocation11], %s561
          %563 = dma.done %s559, 128
        $region64: #{tpu_custom_call.1} parent=59 // pred_fallthru
          _
      $region60: #{tpu_custom_call.1} parent=5 // pred_fallthru
        _
    $region6: #{tpu_custom_call.1} parent=1 // loop_footer
      %s22 = sadd.s32 1, %s18
    $region7: #{tpu_custom_call.1} parent=1 // loop_footer_branch
      %17 = sbr.rel target = $region3
    $region8: #{tpu_custom_call.1} parent=1 // loop_exit
      _
    %564 = vsyncpa [#allocation6], 1
    %s565 = scalar_lea.sflag [#allocation6], 1
    %566 = vsyncpa %s565, 1
    %567 = vsyncpa [#allocation9], 1
    %s568 = scalar_lea.sflag [#allocation9], 1
    %569 = vsyncpa %s568, 1
    %570 = vsyncpa [#allocation7], 1
    %s571 = scalar_lea.sflag [#allocation7], 1
    %572 = vsyncpa %s571, 1

</llo_original>
